<compile_context>
chip_gen: v7x
topology: tpu7x:2x2x1
jax: 0.10.0
libtpu: 0.0.40
codegen_flags: <defaults>
</compile_context>

<pallas_src>
import jax
import jax.numpy as jnp
from jax.experimental import pallas as pl
from jax.experimental.pallas import tpu as pltpu


def adaptive_net_kernel(x_ref, w1_ref, b1_ref, w2t_ref, b2_ref, o_ref):
    # Fused first layer, all 3 heads: (TB, D_in) @ (D_in, 3H) -> (TB, 3H).
    # bf16 (or f32) inputs, f32 accumulation on the MXU.
    hid = jnp.dot(x_ref[...], w1_ref[...], preferred_element_type=jnp.float32)
    hid = jnp.maximum(hid + b1_ref[...], 0.0)                      # bias + ReLU (VPU)

    # Lane-dense block-diagonal second layer: (3, 3H) x (TB, 3H)^T -> (3, TB).
    logits = jax.lax.dot_general(
        w2t_ref[...], hid,
        dimension_numbers=(((1,), (1,)), ((), ())),
        preferred_element_type=jnp.float32)
    o_ref[...] = jax.nn.sigmoid(logits + b2_ref[...]).astype(o_ref.dtype)


def _round_up(x, m):
    return -(-x // m) * m


def _pack_params(w1s, b1s, w2s, b2s, x_dtype):
    """Fuse the 3 heads' parameters into kernel-friendly layouts (wrapper-side)."""
    _, H, D_in = w1s.shape
    HH = 3 * H
    # First-layer weights, pre-transposed & concatenated on the lane axis:
    # column h*H + j of w1_all is head h, hidden unit j.
    w1_all = jnp.transpose(w1s, (2, 0, 1)).reshape(D_in, HH).astype(x_dtype)
    b1_row = b1s.reshape(1, HH).astype(jnp.float32)
    # Second layer, already transposed for a (3, TB) lane-dense result:
    # w2t[c, h*H + j] = w2s[h, j] if c == h else 0 (block diagonal).
    eye3 = jnp.eye(3, dtype=jnp.float32)
    w2t = (eye3[:, :, None] * w2s.astype(jnp.float32)[None, :, :]).reshape(3, HH)
    b2_col = b2s.reshape(3, 1).astype(jnp.float32)
    return w1_all, b1_row, w2t, b2_col


def adaptive_net(x, w1s, b1s, w2s, b2s, *, tb=None, x_dtype=jnp.bfloat16,
                 min_pallas_batch=1024):
    """x: (B, D_in); w1s: (3, H, D_in); b1s: (3, H); w2s: (3, H); b2s: (3, 1).

    Returns (B, 3) float32 (or (3,) if B == 1, matching torch's .squeeze()).
    If `tb` is given it must be a multiple of 128.
    """
    B, D_in = x.shape
    H = w1s.shape[1]
    HH = 3 * H

    # ---- small-B fast path: a fused XLA HLO beats any kernel launch here ----
    if tb is None and B < min_pallas_batch:
        w1_all, b1_row, w2t, b2_col = _pack_params(w1s, b1s, w2s, b2s, jnp.float32)
        hid = jnp.maximum(jnp.dot(x.astype(jnp.float32), w1_all) + b1_row, 0.0)
        out = jax.nn.sigmoid(hid @ w2t.T + b2_col[:, 0][None, :])
        return jnp.squeeze(out) if B == 1 else out

    w1_all, b1_row, w2t, b2_col = _pack_params(w1s, b1s, w2s, b2s, x_dtype)

    # ---- batch tile: biggest block fitting a conservative VMEM budget -------
    if tb is None:
        lane = 128
        x_row = 2 * _round_up(D_in, lane) * jnp.dtype(x_dtype).itemsize  # x, 2 bufs
        hid_row = 2 * _round_up(HH, lane) * 4                            # f32 hid temps
        out_row = 2 * 8 * 4                                              # (3->8, tb) out, 2 bufs
        per_row = x_row + hid_row + out_row
        budget = 20 << 20                                                # of 40 MiB scoped limit
        tb_cap = max(128, min(16384, (budget // per_row) // lane * lane))
        # Keep >= ~8 grid steps when B allows: pipeline ramp + both v7x TensorCores.
        tb = max(128, min(tb_cap, _round_up(pl.cdiv(B, 8), lane)))
    assert tb % 128 == 0, "tb must be a multiple of 128 (lane-dense (3, tb) output)"

    grid = (pl.cdiv(B, tb),)

    flops = 2 * B * D_in * HH + 2 * B * HH * 3
    bytes_accessed = (B * D_in * jnp.dtype(x_dtype).itemsize
                      + 4 * (w1_all.size + b1_row.size + w2t.size + b2_col.size + 3 * B))

    out_t = pl.pallas_call(
        adaptive_net_kernel,
        out_shape=jax.ShapeDtypeStruct((3, B), jnp.float32),
        grid_spec=pltpu.PrefetchScalarGridSpec(
            num_scalar_prefetch=0,
            grid=grid,
            in_specs=[
                pl.BlockSpec((tb, D_in), lambda i: (i, 0)),   # x tile (the only big stream)
                pl.BlockSpec((D_in, HH), lambda i: (0, 0)),   # W1_all (VMEM-resident)
                pl.BlockSpec((1, HH),    lambda i: (0, 0)),   # b1 row (resident)
                pl.BlockSpec((3, HH),    lambda i: (0, 0)),   # W2^T block-diag (resident)
                pl.BlockSpec((3, 1),     lambda i: (0, 0)),   # b2 column (resident)
            ],
            out_specs=pl.BlockSpec((3, tb), lambda i: (0, i)),  # lane-dense output
        ),
        compiler_params=pltpu.CompilerParams(
            dimension_semantics=("parallel",),
            vmem_limit_bytes=40 << 20,
        ),
        cost_estimate=pl.CostEstimate(
            flops=flops, transcendentals=3 * B, bytes_accessed=bytes_accessed),
    )(x.astype(x_dtype), w1_all, b1_row, w2t, b2_col)

    out = out_t.T                      # (B, 3); tiny vs the x stream, done by XLA
    return jnp.squeeze(out) if B == 1 else out


def adaptive_net_ref(x, w1s, b1s, w2s, b2s):
    """Pure-JAX reference mirroring the PyTorch forward."""
    outs = []
    for h in range(3):
        hid = jnp.maximum(x @ w1s[h].T + b1s[h], 0.0)
        logit = hid @ w2s[h][:, None] + b2s[h][None, :]
        outs.append(jax.nn.sigmoid(logit))                 # (B, 1)
    return jnp.squeeze(jnp.stack(outs, axis=1))            # (B, 3) or (3,) if B == 1


if __name__ == "__main__":
    D_in, width = 16, 32

    key = jax.random.PRNGKey(0)
    k1, k2, k3, k4, kx_small, kx_big = jax.random.split(key, 6)

    # Deterministic synthetic parameters (PyTorch-Linear-like uniform scale).
    bound1 = 1.0 / (D_in ** 0.5)
    bound2 = 1.0 / (width ** 0.5)
    w1s = jax.random.uniform(k1, (3, width, D_in), jnp.float32, -bound1, bound1)
    b1s = jax.random.uniform(k2, (3, width), jnp.float32, -bound1, bound1)
    w2s = jax.random.uniform(k3, (3, width), jnp.float32, -bound2, bound2)
    b2s = jax.random.uniform(k4, (3, 1), jnp.float32, -bound2, bound2)

    # 1) Small-B fast path (pure-XLA fusion) + B == 1 squeeze parity.
    x8 = jax.random.normal(kx_small, (8, D_in), jnp.float32)
    out8 = jax.block_until_ready(adaptive_net(x8, w1s, b1s, w2s, b2s))
    ref8 = adaptive_net_ref(x8, w1s, b1s, w2s, b2s)
    assert out8.shape == (8, 3), out8.shape
    assert jnp.allclose(out8, ref8, atol=2e-3, rtol=0), "small-B mismatch"
    out1 = adaptive_net(x8[:1], w1s, b1s, w2s, b2s)
    assert out1.shape == (3,), out1.shape

    # 2) Pallas path, f32 inputs (multi-step grid), near-exact vs reference.
    B = 2048
    xb = jax.random.normal(kx_big, (B, D_in), jnp.float32)
    refb = adaptive_net_ref(xb, w1s, b1s, w2s, b2s)
    out_f32 = jax.block_until_ready(
        adaptive_net(xb, w1s, b1s, w2s, b2s, x_dtype=jnp.float32))
    assert out_f32.shape == (B, 3), out_f32.shape
    assert jnp.allclose(out_f32, refb, atol=5e-3, rtol=0), "f32 Pallas mismatch"

    # 3) Pallas path, default bf16-x first matmul (accuracy gate for the bf16 change).
    out_bf16 = jax.block_until_ready(adaptive_net(xb, w1s, b1s, w2s, b2s))
    assert out_bf16.shape == (B, 3), out_bf16.shape
    assert jnp.allclose(out_bf16, refb, atol=2.5e-2, rtol=0), "bf16 Pallas mismatch"

    # 4) Ragged B (not a multiple of the tile): partial last block handled.
    Br = 1000
    out_r = jax.block_until_ready(
        adaptive_net(xb[:Br], w1s, b1s, w2s, b2s, min_pallas_batch=1))
    assert out_r.shape == (Br, 3), out_r.shape
    assert jnp.allclose(out_r, refb[:Br], atol=2.5e-2, rtol=0), "ragged-B mismatch"

    print("KERNEL_OK")
</pallas_src>

<mosaic_0001>
module attributes {stable_mosaic.version = 11 : i64} {
  func.func @adaptive_net_kernel(%arg0: i32, %arg1: memref<256x16xf32, #tpu.memory_space<vmem>>, %arg2: memref<16x96xf32, #tpu.memory_space<vmem>>, %arg3: memref<1x96xf32, #tpu.memory_space<vmem>>, %arg4: memref<3x96xf32, #tpu.memory_space<vmem>>, %arg5: memref<3x1xf32, #tpu.memory_space<vmem>>, %arg6: memref<3x256xf32, #tpu.memory_space<vmem>>) attributes {dimension_semantics = [#tpu.dimension_semantics<parallel>], iteration_bounds = array<i64: 8>, scalar_prefetch = 0 : i64, scratch_operands = 0 : i64, tpu.core_type = #tpu.core_type<tc>, window_params = [{transform_indices = @transform_0, window_bounds = array<i64: 256, 16>}, {pipeline_mode = #tpu.pipeline_mode<synchronous>, transform_indices = @transform_1, window_bounds = array<i64: 16, 96>}, {pipeline_mode = #tpu.pipeline_mode<synchronous>, transform_indices = @transform_2, window_bounds = array<i64: 1, 96>}, {pipeline_mode = #tpu.pipeline_mode<synchronous>, transform_indices = @transform_3, window_bounds = array<i64: 3, 96>}, {pipeline_mode = #tpu.pipeline_mode<synchronous>, transform_indices = @transform_4, window_bounds = array<i64: 3, 1>}, {transform_indices = @transform_5, window_bounds = array<i64: 3, 256>}]} {
    %c0 = arith.constant 0 : index
    %c0_0 = arith.constant 0 : index
    %0 = vector.load %arg1[%c0, %c0_0] : memref<256x16xf32, #tpu.memory_space<vmem>>, vector<256x16xf32>
    %c0_1 = arith.constant 0 : index
    %c0_2 = arith.constant 0 : index
    %1 = vector.load %arg2[%c0_1, %c0_2] : memref<16x96xf32, #tpu.memory_space<vmem>>, vector<16x96xf32>
    %cst = arith.constant dense<0.000000e+00> : vector<256x96xf32>
    %2 = tpu.matmul %0, %1, %cst {dimension_numbers = #tpu.dot_dimension_numbers<[1], [0], [0], [1], [0, 0, 1, 1], [], []>} : vector<256x16xf32>, vector<16x96xf32>, vector<256x96xf32> -> vector<256x96xf32>
    %c0_3 = arith.constant 0 : index
    %c0_4 = arith.constant 0 : index
    %3 = vector.load %arg3[%c0_3, %c0_4] : memref<1x96xf32, #tpu.memory_space<vmem>>, vector<1x96xf32>
    %4 = vector.broadcast %3 : vector<1x96xf32> to vector<256x96xf32>
    %5 = arith.addf %2, %4 : vector<256x96xf32>
    %cst_5 = arith.constant 0.000000e+00 : f32
    %6 = vector.broadcast %cst_5 : f32 to vector<256x96xf32>
    %7 = arith.maximumf %5, %6 : vector<256x96xf32>
    %c0_6 = arith.constant 0 : index
    %c0_7 = arith.constant 0 : index
    %8 = vector.load %arg4[%c0_6, %c0_7] : memref<3x96xf32, #tpu.memory_space<vmem>>, vector<3x96xf32>
    %cst_8 = arith.constant dense<0.000000e+00> : vector<3x256xf32>
    %9 = tpu.matmul %8, %7, %cst_8 {dimension_numbers = #tpu.dot_dimension_numbers<[1], [1], [0], [0], [0, 0, 1, 0], [], []>} : vector<3x96xf32>, vector<256x96xf32>, vector<3x256xf32> -> vector<3x256xf32>
    %c0_9 = arith.constant 0 : index
    %c0_10 = arith.constant 0 : index
    %10 = vector.load %arg5[%c0_9, %c0_10] : memref<3x1xf32, #tpu.memory_space<vmem>>, vector<3x1xf32>
    %11 = vector.broadcast %10 : vector<3x1xf32> to vector<3x256xf32>
    %12 = arith.addf %9, %11 : vector<3x256xf32>
    %13 = arith.negf %12 : vector<3x256xf32>
    %14 = math.exp %13 : vector<3x256xf32>
    %cst_11 = arith.constant 1.000000e+00 : f32
    %15 = vector.broadcast %cst_11 : f32 to vector<3x256xf32>
    %16 = arith.addf %15, %14 : vector<3x256xf32>
    %17 = arith.divf %15, %16 : vector<3x256xf32>
    %c0_12 = arith.constant 0 : index
    %c0_13 = arith.constant 0 : index
    %18 = vector.load %arg6[%c0_12, %c0_13] : memref<3x256xf32, #tpu.memory_space<vmem>>, vector<3x256xf32>
    tpu.vector_store %arg6[%c0_12, %c0_13], %17 {strides = array<i32>} : memref<3x256xf32, #tpu.memory_space<vmem>>, vector<3x256xf32>,
    return
  }
  func.func @transform_0(%arg0: i32) -> (i32, i32) {
    %c0_i32 = arith.constant 0 : i32
    %c0_i32_0 = arith.constant 0 : i32
    return %arg0, %c0_i32 : i32, i32
  }
  func.func @transform_1(%arg0: i32) -> (i32, i32) {
    %c0_i32 = arith.constant 0 : i32
    %c0_i32_0 = arith.constant 0 : i32
    %c0_i32_1 = arith.constant 0 : i32
    return %c0_i32, %c0_i32_0 : i32, i32
  }
  func.func @transform_2(%arg0: i32) -> (i32, i32) {
    %c0_i32 = arith.constant 0 : i32
    %c0_i32_0 = arith.constant 0 : i32
    %c0_i32_1 = arith.constant 0 : i32
    return %c0_i32, %c0_i32_0 : i32, i32
  }
  func.func @transform_3(%arg0: i32) -> (i32, i32) {
    %c0_i32 = arith.constant 0 : i32
    %c0_i32_0 = arith.constant 0 : i32
    %c0_i32_1 = arith.constant 0 : i32
    return %c0_i32, %c0_i32_0 : i32, i32
  }
  func.func @transform_4(%arg0: i32) -> (i32, i32) {
    %c0_i32 = arith.constant 0 : i32
    %c0_i32_0 = arith.constant 0 : i32
    %c0_i32_1 = arith.constant 0 : i32
    return %c0_i32, %c0_i32_0 : i32, i32
  }
  func.func @transform_5(%arg0: i32) -> (i32, i32) {
    %c0_i32 = arith.constant 0 : i32
    %c0_i32_0 = arith.constant 0 : i32
    return %c0_i32, %arg0 : i32, i32
  }
}

</mosaic_0001>

<llo_original>
// kernel: tpu_custom_call.1
$region0: #{tpu_custom_call.1}
  #allocation0 [shape = 'u32[]', space=smem, size = 0x4, offset = 0x4, fixed_abs, tag = 'smem constant byte address 0x4 - core index']
  #allocation1 [shape = 'u32[144,128]{1,0:T(1,128)}', space=vmem, size = 0x12000, scoped, tag = 'internal scratch']
  %s0 = inlined_call_operand.vmem [shape: f32[2048,16], index: 0, kind: input, shape index: {}]
  %s1 = inlined_call_operand.vmem [shape: f32[16,96], index: 1, kind: input, shape index: {}]
  %s2 = inlined_call_operand.vmem [shape: f32[1,96], index: 2, kind: input, shape index: {}]
  %s3 = inlined_call_operand.vmem [shape: f32[3,96], index: 3, kind: input, shape index: {}]
  %s4 = inlined_call_operand.vmem [shape: f32[3,1], index: 4, kind: input, shape index: {}]
  %s5 = inlined_call_operand.hbm [shape: f32[3,2048], index: 5, kind: output, shape index: {}]
  %s6 = sld [smem:[#allocation0]]
  $region53: #{tpu_custom_call.1} parent=0
    _
  %s8 = ssub.s32 1, %s6
  %s9 = scalar_select 0, %s8, %s6
  $region1: #{tpu_custom_call.1} parent=0
    #allocation2 [shape = 'u8[8192]{0}', space=vmem, size = 0x2000, scoped, tag = 'output window, operand 0']
    #allocation3 [shape = 's32[2]{0}', space=sflag, size = 0x8, scoped, tag = 'scoped memory for tpu_custom_call.1']
    %10 = vsyncpa [#allocation3], 0
    %s11 = scalar_lea.sflag [#allocation3], 1
    %12 = vsyncpa %s11, 0
    loop: start=0, step=1, limit=10
    $region2: #{tpu_custom_call.1} parent=1 // loop_pre_header
      _
    $region3: #{tpu_custom_call.1} parent=1 // loop_header
      %s14 = sphi 0, %s18
      %p15 = scmp.ge.s32.totalorder %s14, 10
      %s24 = sphi 0, %s26
      %s27 = sphi 0, %s24
      %s28 = sphi 0, %s27
      %s44 = sphi 0, %s28
      %s48 = sphi 0, %s48
      %s50 = sphi 0, %s48
      %s51 = sphi 0, %s50
      %s65 = sphi 0, %s51
      %s69 = sphi 0, %s69
      %s71 = sphi 0, %s69
      %s72 = sphi 0, %s71
      %s86 = sphi 0, %s72
      %s90 = sphi 0, %s90
      %s92 = sphi 0, %s90
      %s93 = sphi 0, %s92
      %s107 = sphi 0, %s93
      %s111 = sphi 0, %s111
      %s113 = sphi 0, %s111
      %s114 = sphi 0, %s113
      %s128 = sphi 0, %s114
      %s134 = sphi 0, %s136
      %s137 = sphi 0, %s134
      %s138 = sphi 0, %s137
      %s154 = sphi 0, %s138
    $region4: #{tpu_custom_call.1} parent=1 // loop_header_branch
      %17 = sbr.rel (%p15) target = $region8
    $region5: #{tpu_custom_call.1} parent=1 // loop_body
      %s19 = ssub.s32 %s14, 1
      %s20 = ssub.s32 %s14, 2
      %s21 = sadd.s32 %s14, 1
      %s22 = ssub.s32 %s14, %s21
      %p23 = scmp.eq.s32.totalorder %s22, 0
      %s25 = sadd.s32 %s24, 1
      %s26 = scalar_select %p23, %s24, %s25
      %p29 = pneg %p23
      %p30 = scmp.eq.s32.totalorder %s14, 7
      %p31 = por %p29, %p30
      %p32 = scmp.ne.s32.totalorder %s24, %s27
      %p33 = scmp.eq.s32.totalorder %s14, 0
      %p34 = por %p32, %p33
      %p35 = scmp.ne.s32.totalorder %s24, %s27
      %p36 = scmp.eq.s32.totalorder %s19, 7
      %p37 = por %p35, %p36
      %p38 = scmp.ne.s32.totalorder %s27, %s28
      %p39 = scmp.eq.s32.totalorder %s19, 0
      %p40 = por %p38, %p39
      %p41 = scmp.ne.s32.totalorder %s27, %s28
      %p42 = scmp.eq.s32.totalorder %s20, 7
      %p43 = por %p41, %p42
      %p45 = scmp.ne.s32.totalorder %s28, %s44
      %p46 = scmp.eq.s32.totalorder %s20, 0
      %p47 = por %p45, %p46
      %s49 = sadd.s32 %s48, 1
      %p52 = scmp.eq.s32.totalorder %s14, 7
      %p53 = scmp.ne.s32.totalorder %s48, %s50
      %p54 = scmp.eq.s32.totalorder %s14, 0
      %p55 = por %p53, %p54
      %p56 = scmp.ne.s32.totalorder %s48, %s50
      %p57 = scmp.eq.s32.totalorder %s19, 7
      %p58 = por %p56, %p57
      %p59 = scmp.ne.s32.totalorder %s50, %s51
      %p60 = scmp.eq.s32.totalorder %s19, 0
      %p61 = por %p59, %p60
      %p62 = scmp.ne.s32.totalorder %s50, %s51
      %p63 = scmp.eq.s32.totalorder %s20, 7
      %p64 = por %p62, %p63
      %p66 = scmp.ne.s32.totalorder %s51, %s65
      %p67 = scmp.eq.s32.totalorder %s20, 0
      %p68 = por %p66, %p67
      %s70 = sadd.s32 %s69, 1
      %p73 = scmp.eq.s32.totalorder %s14, 7
      %p74 = scmp.ne.s32.totalorder %s69, %s71
      %p75 = scmp.eq.s32.totalorder %s14, 0
      %p76 = por %p74, %p75
      %p77 = scmp.ne.s32.totalorder %s69, %s71
      %p78 = scmp.eq.s32.totalorder %s19, 7
      %p79 = por %p77, %p78
      %p80 = scmp.ne.s32.totalorder %s71, %s72
      %p81 = scmp.eq.s32.totalorder %s19, 0
      %p82 = por %p80, %p81
      %p83 = scmp.ne.s32.totalorder %s71, %s72
      %p84 = scmp.eq.s32.totalorder %s20, 7
      %p85 = por %p83, %p84
      %p87 = scmp.ne.s32.totalorder %s72, %s86
      %p88 = scmp.eq.s32.totalorder %s20, 0
      %p89 = por %p87, %p88
      %s91 = sadd.s32 %s90, 1
      %p94 = scmp.eq.s32.totalorder %s14, 7
      %p95 = scmp.ne.s32.totalorder %s90, %s92
      %p96 = scmp.eq.s32.totalorder %s14, 0
      %p97 = por %p95, %p96
      %p98 = scmp.ne.s32.totalorder %s90, %s92
      %p99 = scmp.eq.s32.totalorder %s19, 7
      %p100 = por %p98, %p99
      %p101 = scmp.ne.s32.totalorder %s92, %s93
      %p102 = scmp.eq.s32.totalorder %s19, 0
      %p103 = por %p101, %p102
      %p104 = scmp.ne.s32.totalorder %s92, %s93
      %p105 = scmp.eq.s32.totalorder %s20, 7
      %p106 = por %p104, %p105
      %p108 = scmp.ne.s32.totalorder %s93, %s107
      %p109 = scmp.eq.s32.totalorder %s20, 0
      %p110 = por %p108, %p109
      %s112 = sadd.s32 %s111, 1
      %p115 = scmp.eq.s32.totalorder %s14, 7
      %p116 = scmp.ne.s32.totalorder %s111, %s113
      %p117 = scmp.eq.s32.totalorder %s14, 0
      %p118 = por %p116, %p117
      %p119 = scmp.ne.s32.totalorder %s111, %s113
      %p120 = scmp.eq.s32.totalorder %s19, 7
      %p121 = por %p119, %p120
      %p122 = scmp.ne.s32.totalorder %s113, %s114
      %p123 = scmp.eq.s32.totalorder %s19, 0
      %p124 = por %p122, %p123
      %p125 = scmp.ne.s32.totalorder %s113, %s114
      %p126 = scmp.eq.s32.totalorder %s20, 7
      %p127 = por %p125, %p126
      %p129 = scmp.ne.s32.totalorder %s114, %s128
      %p130 = scmp.eq.s32.totalorder %s20, 0
      %p131 = por %p129, %p130
      %s132 = ssub.s32 %s14, %s21
      %p133 = scmp.eq.s32.totalorder %s132, 0
      %s135 = sadd.s32 %s134, 1
      %s136 = scalar_select %p133, %s134, %s135
      %p139 = pneg %p133
      %p140 = scmp.eq.s32.totalorder %s14, 7
      %p141 = por %p139, %p140
      %p142 = scmp.ne.s32.totalorder %s134, %s137
      %p143 = scmp.eq.s32.totalorder %s14, 0
      %p144 = por %p142, %p143
      %p145 = scmp.ne.s32.totalorder %s134, %s137
      %p146 = scmp.eq.s32.totalorder %s19, 7
      %p147 = por %p145, %p146
      %p148 = scmp.ne.s32.totalorder %s137, %s138
      %p149 = scmp.eq.s32.totalorder %s19, 0
      %p150 = por %p148, %p149
      %p151 = scmp.ne.s32.totalorder %s137, %s138
      %p152 = scmp.eq.s32.totalorder %s20, 7
      %p153 = por %p151, %p152
      %p155 = scmp.ne.s32.totalorder %s138, %s154
      %p156 = scmp.eq.s32.totalorder %s20, 0
      %p157 = por %p155, %p156
      %p158 = scmp.le.s32.totalorder 1, %s14
      %p159 = scmp.lt.s32.totalorder %s14, 9
      %p160 = pnand %p158, %p159
      %p161 = pneg %p160
      // Predicated region
      $region9: #{tpu_custom_call.1} parent=5 // pred_check
        _
      $region10: #{tpu_custom_call.1} parent=5 // pred_check_branch
        %163 = sbr.rel (%p160) target = $region12
      $region11: #{tpu_custom_call.1} parent=5 // pred_region
        %s164 = ssub.s32 %s14, 1
        // Predicated region
        $region13: #{tpu_custom_call.1} parent=11 // pred_check
          %p165 = pneg %p61
        $region14: #{tpu_custom_call.1} parent=11 // pred_check_branch
          %167 = sbr.rel (%p165) target = $region16
        $region15: #{tpu_custom_call.1} parent=11 // pred_region
          _
        $region16: #{tpu_custom_call.1} parent=11 // pred_fallthru
          _
        // Predicated region
        $region17: #{tpu_custom_call.1} parent=11 // pred_check
          %p168 = pneg %p82
        $region18: #{tpu_custom_call.1} parent=11 // pred_check_branch
          %170 = sbr.rel (%p168) target = $region20
        $region19: #{tpu_custom_call.1} parent=11 // pred_region
          _
        $region20: #{tpu_custom_call.1} parent=11 // pred_fallthru
          _
        // Predicated region
        $region21: #{tpu_custom_call.1} parent=11 // pred_check
          %p171 = pneg %p103
        $region22: #{tpu_custom_call.1} parent=11 // pred_check_branch
          %173 = sbr.rel (%p171) target = $region24
        $region23: #{tpu_custom_call.1} parent=11 // pred_region
          _
        $region24: #{tpu_custom_call.1} parent=11 // pred_fallthru
          _
        // Predicated region
        $region25: #{tpu_custom_call.1} parent=11 // pred_check
          %p174 = pneg %p124
        $region26: #{tpu_custom_call.1} parent=11 // pred_check_branch
          %176 = sbr.rel (%p174) target = $region28
        $region27: #{tpu_custom_call.1} parent=11 // pred_region
          _
        $region28: #{tpu_custom_call.1} parent=11 // pred_fallthru
          _
      $region12: #{tpu_custom_call.1} parent=5 // pred_fallthru
        _
      %p177 = scmp.lt.s32.totalorder %s14, 8
      // Predicated region
      $region29: #{tpu_custom_call.1} parent=5 // pred_check
        %p178 = pneg %p177
      $region30: #{tpu_custom_call.1} parent=5 // pred_check_branch
        %180 = sbr.rel (%p178) target = $region32
      $region31: #{tpu_custom_call.1} parent=5 // pred_region
        // Predicated region
        $region33: #{tpu_custom_call.1} parent=31 // pred_check
          %p181 = pneg %p34
        $region34: #{tpu_custom_call.1} parent=31 // pred_check_branch
          %183 = sbr.rel (%p181) target = $region36
        $region35: #{tpu_custom_call.1} parent=31 // pred_region
          %s184 = smul.u32 32, %s14
          %p185 = scmp.lt.s32.totalorder %s184, 255
          %s186 = scalar_select %p185, %s184, 255
          %s187 = smul.addr %s186, 8
          %s188 = scalar_lea.vmem %s0, %s187
          %s189 = smul.u32 32, %s14
        $region36: #{tpu_custom_call.1} parent=31 // pred_fallthru
          _
      $region32: #{tpu_custom_call.1} parent=5 // pred_fallthru
        _
      %p190 = scmp.le.s32.totalorder 1, %s14
      %p191 = scmp.lt.s32.totalorder %s14, 9
      %p192 = pnand %p190, %p191
      %p193 = pneg %p192
      // Predicated region
      $region37: #{tpu_custom_call.1} parent=5 // pred_check
        _
      $region38: #{tpu_custom_call.1} parent=5 // pred_check_branch
        %195 = sbr.rel (%p192) target = $region40
      $region39: #{tpu_custom_call.1} parent=5 // pred_region
        %s196 = ssub.s32 %s14, 1
        %s197 = smul.u32 32, %s19
        %p198 = scmp.lt.s32.totalorder %s197, 255
        %s199 = scalar_select %p198, %s197, 255
        %s200 = smul.addr %s199, 8
        %s201 = scalar_lea.vmem %s0, %s200
        %p202 = pneg %p40
        %p203 = pneg %p37
        %p204 = pneg %p61
        %p205 = pneg %p58
        %p206 = pneg %p82
        %p207 = pneg %p79
        %p208 = pneg %p103
        %p209 = pneg %p100
        %p210 = pneg %p124
        %p211 = pneg %p121
        %p212 = pneg %p150
        %p213 = pneg %p147
        %s214 = sand.u32 %s137, 1
        %s215 = scalar_lea.sflag [#allocation3], %s214
        %s216 = sand.u32 %s137, 1
        %s217 = smul.addr %s216, 8
        %s218 = scalar_lea.vmem [#allocation2], %s217
        %s219 = smul.u32 32, %s19
        %p220 = scmp.lt.s32.totalorder %s219, 255
        %s221 = scalar_select %p220, %s219, 255
        %s222 = smul.addr %s221, 8
        %s223 = scalar_lea.vmem %s0, %s222
        %s224 = smul.u32 32, %s19
        %s225 = smul.u32 2, %s19
        %v226 = vld [vmem:[%s223] sm:$0xff]
        %v227 = vld [vmem:[%s223 + $0x8] sm:$0xff]
        %v228 = vld [vmem:[%s223 + $0x10] sm:$0xff]
        %v229 = vld [vmem:[%s223 + $0x18] sm:$0xff]
        %v230 = vld [vmem:[%s223 + $0x20] sm:$0xff]
        %v231 = vld [vmem:[%s223 + $0x28] sm:$0xff]
        %v232 = vld [vmem:[%s223 + $0x30] sm:$0xff]
        %v233 = vld [vmem:[%s223 + $0x38] sm:$0xff]
        %v234 = vld [vmem:[%s223 + $0x40] sm:$0xff]
        %v235 = vld [vmem:[%s223 + $0x48] sm:$0xff]
        %v236 = vld [vmem:[%s223 + $0x50] sm:$0xff]
        %v237 = vld [vmem:[%s223 + $0x58] sm:$0xff]
        %v238 = vld [vmem:[%s223 + $0x60] sm:$0xff]
        %v239 = vld [vmem:[%s223 + $0x68] sm:$0xff]
        %v240 = vld [vmem:[%s223 + $0x70] sm:$0xff]
        %v241 = vld [vmem:[%s223 + $0x78] sm:$0xff]
        %v242 = vld [vmem:[%s223 + $0x80] sm:$0xff]
        %v243 = vld [vmem:[%s223 + $0x88] sm:$0xff]
        %v244 = vld [vmem:[%s223 + $0x90] sm:$0xff]
        %v245 = vld [vmem:[%s223 + $0x98] sm:$0xff]
        %v246 = vld [vmem:[%s223 + $0xa0] sm:$0xff]
        %v247 = vld [vmem:[%s223 + $0xa8] sm:$0xff]
        %v248 = vld [vmem:[%s223 + $0xb0] sm:$0xff]
        %v249 = vld [vmem:[%s223 + $0xb8] sm:$0xff]
        %v250 = vld [vmem:[%s223 + $0xc0] sm:$0xff]
        %v251 = vld [vmem:[%s223 + $0xc8] sm:$0xff]
        %v252 = vld [vmem:[%s223 + $0xd0] sm:$0xff]
        %v253 = vld [vmem:[%s223 + $0xd8] sm:$0xff]
        %v254 = vld [vmem:[%s223 + $0xe0] sm:$0xff]
        %v255 = vld [vmem:[%s223 + $0xe8] sm:$0xff]
        %v256 = vld [vmem:[%s223 + $0xf0] sm:$0xff]
        %v257 = vld [vmem:[%s223 + $0xf8] sm:$0xff]
        %v258 = vld [vmem:[%s1] sm:$0xff]
        %v259 = vld [vmem:[%s1 + $0x8] sm:$0xff]
        %v260 = vld [vmem:[%s2] sm:$0x1]
        %v262 = vlaneseq
        %v263 = vshrl.u32 %v262, 7
        %v264 = vsub.s32 0, %v263
        %v265 = vrot.slane %v260, %v264
        %vm267 = vcmask 130048
        %v269 = vsel %vm267, %v226, 0
        %v272 = vsel %vm267, %v227, 0
        %v275 = vsel %vm267, %v228, 0
        %v278 = vsel %vm267, %v229, 0
        %v281 = vsel %vm267, %v230, 0
        %v284 = vsel %vm267, %v231, 0
        %v287 = vsel %vm267, %v232, 0
        %v290 = vsel %vm267, %v233, 0
        %v293 = vsel %vm267, %v234, 0
        %v296 = vsel %vm267, %v235, 0
        %v299 = vsel %vm267, %v236, 0
        %v302 = vsel %vm267, %v237, 0
        %v305 = vsel %vm267, %v238, 0
        %v308 = vsel %vm267, %v239, 0
        %v311 = vsel %vm267, %v240, 0
        %v314 = vsel %vm267, %v241, 0
        %v317 = vsel %vm267, %v242, 0
        %v320 = vsel %vm267, %v243, 0
        %v323 = vsel %vm267, %v244, 0
        %v326 = vsel %vm267, %v245, 0
        %v329 = vsel %vm267, %v246, 0
        %v332 = vsel %vm267, %v247, 0
        %v335 = vsel %vm267, %v248, 0
        %v338 = vsel %vm267, %v249, 0
        %v341 = vsel %vm267, %v250, 0
        %v344 = vsel %vm267, %v251, 0
        %v347 = vsel %vm267, %v252, 0
        %v350 = vsel %vm267, %v253, 0
        %v353 = vsel %vm267, %v254, 0
        %v356 = vsel %vm267, %v255, 0
        %v359 = vsel %vm267, %v256, 0
        %v362 = vsel %vm267, %v257, 0
        %364 = vmatprep.subr.mxu0 0.0
        %365 = vmatpush1.msra.mxu0 %v258
        %366 = vmatprep.subr.mxu0 0.0
        %367 = vmatpush1.msra.mxu0 %v259
        %368 = vmatprep.subr.mxu0 0.0
        %369 = vmatpush1.msra.mxu0 0.0
        %370 = vmatprep.subr.mxu0 0.0
        %371 = vmatpush1.msra.mxu0 0.0
        %372 = vmatprep.subr.mxu0 0.0
        %373 = vmatpush1.msra.mxu0 0.0
        %374 = vmatprep.subr.mxu0 0.0
        %375 = vmatpush1.msra.mxu0 0.0
        %376 = vmatprep.subr.mxu0 0.0
        %377 = vmatpush1.msra.mxu0 0.0
        %378 = vmatprep.subr.mxu0 0.0
        %379 = vmatpush1.msra.mxu0 0.0
        %380 = vmatprep.subr.mxu0 0.0
        %381 = vmatpush1.msra.mxu0 0.0
        %382 = vmatprep.subr.mxu0 0.0
        %383 = vmatpush1.msra.mxu0 0.0
        %384 = vmatprep.subr.mxu0 0.0
        %385 = vmatpush1.msra.mxu0 0.0
        %386 = vmatprep.subr.mxu0 0.0
        %387 = vmatpush1.msra.mxu0 0.0
        %388 = vmatprep.subr.mxu0 0.0
        %389 = vmatpush1.msra.mxu0 0.0
        %390 = vmatprep.subr.mxu0 0.0
        %391 = vmatpush1.msra.mxu0 0.0
        %392 = vmatprep.subr.mxu0 0.0
        %393 = vmatpush1.msra.mxu0 0.0
        %394 = vmatprep.subr.mxu0 0.0
        %395 = vmatpush1.msra.mxu0 0.0
        %396 = vmatprep.subr.mxu0 0.0
        %397 = vmatpush1.msra.mxu0 0.0
        %398 = vmatprep.subr.mxu0 0.0
        %399 = vmatpush1.msra.mxu0 0.0
        %400 = vmatprep.subr.mxu0 0.0
        %401 = vmatpush1.msra.mxu0 0.0
        %402 = vmatprep.subr.mxu0 0.0
        %403 = vmatpush1.msra.mxu0 0.0
        %404 = vmatprep.subr.mxu0 0.0
        %405 = vmatpush1.msra.mxu0 0.0
        %406 = vmatprep.subr.mxu0 0.0
        %407 = vmatpush1.msra.mxu0 0.0
        %408 = vmatprep.subr.mxu0 0.0
        %409 = vmatpush1.msra.mxu0 0.0
        %410 = vmatprep.subr.mxu0 0.0
        %411 = vmatpush1.msra.mxu0 0.0
        %412 = vmatprep.subr.mxu0 0.0
        %413 = vmatpush1.msra.mxu0 0.0
        %414 = vmatprep.subr.mxu0 0.0
        %415 = vmatpush1.msra.mxu0 0.0
        %416 = vmatprep.subr.mxu0 0.0
        %417 = vmatpush1.msra.mxu0 0.0
        %418 = vmatprep.subr.mxu0 0.0
        %419 = vmatpush1.msra.mxu0 0.0
        %420 = vmatprep.subr.mxu0 0.0
        %421 = vmatpush1.msra.mxu0 0.0
        %422 = vmatprep.subr.mxu0 0.0
        %423 = vmatpush1.msra.mxu0 0.0
        %424 = vmatprep.subr.mxu0 0.0
        %425 = vmatpush1.msra.mxu0 0.0
        %426 = vmatprep.subr.mxu0 0.0
        %427 = vmatpush1.msra.mxu0 0.0
        %428 = vmatprep.mubr.f32.mxu0 0.0
        %429 = vmatmul.mubr.f32.gmra.mrb[0].mxu0 %v269
        %v430 = vpop.f32.mrb[0].mxu0
        %v431 = vadd.f32 %v265, %v430
        %v432 = vpop.f32.mrb[0].mxu0
        %433 = vmatprep.mubr.f32.mxu0 0.0
        %434 = vmatmul.mubr.f32.gmra.mrb[0].mxu0 %v272
        %v435 = vpop.f32.mrb[0].mxu0
        %v436 = vadd.f32 %v265, %v435
        %v437 = vpop.f32.mrb[0].mxu0
        %438 = vmatprep.mubr.f32.mxu0 0.0
        %439 = vmatmul.mubr.f32.gmra.mrb[0].mxu0 %v275
        %v440 = vpop.f32.mrb[0].mxu0
        %v441 = vadd.f32 %v265, %v440
        %v442 = vpop.f32.mrb[0].mxu0
        %443 = vmatprep.mubr.f32.mxu0 0.0
        %444 = vmatmul.mubr.f32.gmra.mrb[0].mxu0 %v278
        %v445 = vpop.f32.mrb[0].mxu0
        %v446 = vadd.f32 %v265, %v445
        %v447 = vpop.f32.mrb[0].mxu0
        %448 = vmatprep.mubr.f32.mxu0 0.0
        %449 = vmatmul.mubr.f32.gmra.mrb[0].mxu0 %v281
        %v450 = vpop.f32.mrb[0].mxu0
        %v451 = vadd.f32 %v265, %v450
        %v452 = vpop.f32.mrb[0].mxu0
        %453 = vmatprep.mubr.f32.mxu0 0.0
        %454 = vmatmul.mubr.f32.gmra.mrb[0].mxu0 %v284
        %v455 = vpop.f32.mrb[0].mxu0
        %v456 = vadd.f32 %v265, %v455
        %v457 = vpop.f32.mrb[0].mxu0
        %458 = vmatprep.mubr.f32.mxu0 0.0
        %459 = vmatmul.mubr.f32.gmra.mrb[0].mxu0 %v287
        %v460 = vpop.f32.mrb[0].mxu0
        %v461 = vadd.f32 %v265, %v460
        %v462 = vpop.f32.mrb[0].mxu0
        %463 = vmatprep.mubr.f32.mxu0 0.0
        %464 = vmatmul.mubr.f32.gmra.mrb[0].mxu0 %v290
        %v465 = vpop.f32.mrb[0].mxu0
        %v466 = vadd.f32 %v265, %v465
        %v467 = vpop.f32.mrb[0].mxu0
        %468 = vmatprep.mubr.f32.mxu0 0.0
        %469 = vmatmul.mubr.f32.gmra.mrb[0].mxu0 %v293
        %v470 = vpop.f32.mrb[0].mxu0
        %v471 = vadd.f32 %v265, %v470
        %v472 = vpop.f32.mrb[0].mxu0
        %473 = vmatprep.mubr.f32.mxu0 0.0
        %474 = vmatmul.mubr.f32.gmra.mrb[0].mxu0 %v296
        %v475 = vpop.f32.mrb[0].mxu0
        %v476 = vadd.f32 %v265, %v475
        %v477 = vpop.f32.mrb[0].mxu0
        %478 = vmatprep.mubr.f32.mxu0 0.0
        %479 = vmatmul.mubr.f32.gmra.mrb[0].mxu0 %v299
        %v480 = vpop.f32.mrb[0].mxu0
        %v481 = vadd.f32 %v265, %v480
        %v482 = vpop.f32.mrb[0].mxu0
        %483 = vmatprep.mubr.f32.mxu0 0.0
        %484 = vmatmul.mubr.f32.gmra.mrb[0].mxu0 %v302
        %v485 = vpop.f32.mrb[0].mxu0
        %v486 = vadd.f32 %v265, %v485
        %v487 = vpop.f32.mrb[0].mxu0
        %488 = vmatprep.mubr.f32.mxu0 0.0
        %489 = vmatmul.mubr.f32.gmra.mrb[0].mxu0 %v305
        %v490 = vpop.f32.mrb[0].mxu0
        %v491 = vadd.f32 %v265, %v490
        %v492 = vpop.f32.mrb[0].mxu0
        %493 = vmatprep.mubr.f32.mxu0 0.0
        %494 = vmatmul.mubr.f32.gmra.mrb[0].mxu0 %v308
        %v495 = vpop.f32.mrb[0].mxu0
        %v496 = vadd.f32 %v265, %v495
        %v497 = vpop.f32.mrb[0].mxu0
        %498 = vmatprep.mubr.f32.mxu0 0.0
        %499 = vmatmul.mubr.f32.gmra.mrb[0].mxu0 %v311
        %v500 = vpop.f32.mrb[0].mxu0
        %v501 = vadd.f32 %v265, %v500
        %v502 = vpop.f32.mrb[0].mxu0
        %503 = vmatprep.mubr.f32.mxu0 0.0
        %504 = vmatmul.mubr.f32.gmra.mrb[0].mxu0 %v314
        %v505 = vpop.f32.mrb[0].mxu0
        %v506 = vadd.f32 %v265, %v505
        %v507 = vpop.f32.mrb[0].mxu0
        %508 = vmatprep.mubr.f32.mxu0 0.0
        %509 = vmatmul.mubr.f32.gmra.mrb[0].mxu0 %v317
        %v510 = vpop.f32.mrb[0].mxu0
        %v511 = vadd.f32 %v265, %v510
        %v512 = vpop.f32.mrb[0].mxu0
        %513 = vmatprep.mubr.f32.mxu0 0.0
        %514 = vmatmul.mubr.f32.gmra.mrb[0].mxu0 %v320
        %v515 = vpop.f32.mrb[0].mxu0
        %v516 = vadd.f32 %v265, %v515
        %v517 = vpop.f32.mrb[0].mxu0
        %518 = vmatprep.mubr.f32.mxu0 0.0
        %519 = vmatmul.mubr.f32.gmra.mrb[0].mxu0 %v323
        %v520 = vpop.f32.mrb[0].mxu0
        %v521 = vadd.f32 %v265, %v520
        %v522 = vpop.f32.mrb[0].mxu0
        %523 = vmatprep.mubr.f32.mxu0 0.0
        %524 = vmatmul.mubr.f32.gmra.mrb[0].mxu0 %v326
        %v525 = vpop.f32.mrb[0].mxu0
        %v526 = vadd.f32 %v265, %v525
        %v527 = vpop.f32.mrb[0].mxu0
        %528 = vmatprep.mubr.f32.mxu0 0.0
        %529 = vmatmul.mubr.f32.gmra.mrb[0].mxu0 %v329
        %v530 = vpop.f32.mrb[0].mxu0
        %v531 = vadd.f32 %v265, %v530
        %v532 = vpop.f32.mrb[0].mxu0
        %533 = vmatprep.mubr.f32.mxu0 0.0
        %534 = vmatmul.mubr.f32.gmra.mrb[0].mxu0 %v332
        %v535 = vpop.f32.mrb[0].mxu0
        %v536 = vadd.f32 %v265, %v535
        %v537 = vpop.f32.mrb[0].mxu0
        %538 = vmatprep.mubr.f32.mxu0 0.0
        %539 = vmatmul.mubr.f32.gmra.mrb[0].mxu0 %v335
        %v540 = vpop.f32.mrb[0].mxu0
        %v541 = vadd.f32 %v265, %v540
        %v542 = vpop.f32.mrb[0].mxu0
        %543 = vmatprep.mubr.f32.mxu0 0.0
        %544 = vmatmul.mubr.f32.gmra.mrb[0].mxu0 %v338
        %v545 = vpop.f32.mrb[0].mxu0
        %v546 = vadd.f32 %v265, %v545
        %v547 = vpop.f32.mrb[0].mxu0
        %548 = vmatprep.mubr.f32.mxu0 0.0
        %549 = vmatmul.mubr.f32.gmra.mrb[0].mxu0 %v341
        %v550 = vpop.f32.mrb[0].mxu0
        %v551 = vadd.f32 %v265, %v550
        %v552 = vpop.f32.mrb[0].mxu0
        %553 = vmatprep.mubr.f32.mxu0 0.0
        %554 = vmatmul.mubr.f32.gmra.mrb[0].mxu0 %v344
        %v555 = vpop.f32.mrb[0].mxu0
        %v556 = vadd.f32 %v265, %v555
        %v557 = vpop.f32.mrb[0].mxu0
        %558 = vmatprep.mubr.f32.mxu0 0.0
        %559 = vmatmul.mubr.f32.gmra.mrb[0].mxu0 %v347
        %v560 = vpop.f32.mrb[0].mxu0
        %v561 = vadd.f32 %v265, %v560
        %v562 = vpop.f32.mrb[0].mxu0
        %563 = vmatprep.mubr.f32.mxu0 0.0
        %564 = vmatmul.mubr.f32.gmra.mrb[0].mxu0 %v350
        %v565 = vpop.f32.mrb[0].mxu0
        %v566 = vadd.f32 %v265, %v565
        %v567 = vpop.f32.mrb[0].mxu0
        %568 = vmatprep.mubr.f32.mxu0 0.0
        %569 = vmatmul.mubr.f32.gmra.mrb[0].mxu0 %v353
        %v570 = vpop.f32.mrb[0].mxu0
        %v571 = vadd.f32 %v265, %v570
        %v572 = vpop.f32.mrb[0].mxu0
        %573 = vmatprep.mubr.f32.mxu0 0.0
        %574 = vmatmul.mubr.f32.gmra.mrb[0].mxu0 %v356
        %v575 = vpop.f32.mrb[0].mxu0
        %v576 = vadd.f32 %v265, %v575
        %v577 = vpop.f32.mrb[0].mxu0
        %578 = vmatprep.mubr.f32.mxu0 0.0
        %579 = vmatmul.mubr.f32.gmra.mrb[0].mxu0 %v359
        %v580 = vpop.f32.mrb[0].mxu0
        %v581 = vadd.f32 %v265, %v580
        %v582 = vpop.f32.mrb[0].mxu0
        %583 = vmatprep.mubr.f32.mxu0 0.0
        %584 = vmatmul.mubr.f32.gmra.mrb[0].mxu0 %v362
        %v585 = vpop.f32.mrb[0].mxu0
        %v586 = vadd.f32 %v265, %v585
        %v587 = vpop.f32.mrb[0].mxu0
        %588 = vdwg.mxu0
        %v589 = vmax.f32 %v431, 0.0
        %v590 = vmax.f32 %v436, 0.0
        %v591 = vmax.f32 %v441, 0.0
        %v592 = vmax.f32 %v446, 0.0
        %v593 = vmax.f32 %v451, 0.0
        %v594 = vmax.f32 %v456, 0.0
        %v595 = vmax.f32 %v461, 0.0
        %v596 = vmax.f32 %v466, 0.0
        %v597 = vmax.f32 %v471, 0.0
        %v598 = vmax.f32 %v476, 0.0
        %v599 = vmax.f32 %v481, 0.0
        %v600 = vmax.f32 %v486, 0.0
        %v601 = vmax.f32 %v491, 0.0
        %v602 = vmax.f32 %v496, 0.0
        %v603 = vmax.f32 %v501, 0.0
        %v604 = vmax.f32 %v506, 0.0
        %v605 = vmax.f32 %v511, 0.0
        %v606 = vmax.f32 %v516, 0.0
        %v607 = vmax.f32 %v521, 0.0
        %v608 = vmax.f32 %v526, 0.0
        %v609 = vmax.f32 %v531, 0.0
        %v610 = vmax.f32 %v536, 0.0
        %v611 = vmax.f32 %v541, 0.0
        %v612 = vmax.f32 %v546, 0.0
        %v613 = vmax.f32 %v551, 0.0
        %v614 = vmax.f32 %v556, 0.0
        %v615 = vmax.f32 %v561, 0.0
        %v616 = vmax.f32 %v566, 0.0
        %v617 = vmax.f32 %v571, 0.0
        %v618 = vmax.f32 %v576, 0.0
        %v619 = vmax.f32 %v581, 0.0
        %v620 = vmax.f32 %v586, 0.0
        %v621 = vld [vmem:[%s3] sm:$0x7]
        %v622 = vld [vmem:[%s4] sm:$0x7]
        %624 = vset.pattern.permute.xlu0 0
        %625 = vperm.xlu0 %624, %v622
        %v626 = vpop.permute.xlu0 %625
        %vm628 = vcmask 785408
        %v630 = vsel %vm628, %v621, 0
        %v633 = vsel %vm628, %v589, 0
        %v636 = vsel %vm628, %v590, 0
        %v639 = vsel %vm628, %v591, 0
        %v642 = vsel %vm628, %v592, 0
        %v645 = vsel %vm628, %v593, 0
        %v648 = vsel %vm628, %v594, 0
        %v651 = vsel %vm628, %v595, 0
        %v654 = vsel %vm628, %v596, 0
        %v657 = vsel %vm628, %v597, 0
        %v660 = vsel %vm628, %v598, 0
        %v663 = vsel %vm628, %v599, 0
        %v666 = vsel %vm628, %v600, 0
        %v669 = vsel %vm628, %v601, 0
        %v672 = vsel %vm628, %v602, 0
        %v675 = vsel %vm628, %v603, 0
        %v678 = vsel %vm628, %v604, 0
        %v681 = vsel %vm628, %v605, 0
        %v684 = vsel %vm628, %v606, 0
        %v687 = vsel %vm628, %v607, 0
        %v690 = vsel %vm628, %v608, 0
        %v693 = vsel %vm628, %v609, 0
        %v696 = vsel %vm628, %v610, 0
        %v699 = vsel %vm628, %v611, 0
        %v702 = vsel %vm628, %v612, 0
        %v705 = vsel %vm628, %v613, 0
        %v708 = vsel %vm628, %v614, 0
        %v711 = vsel %vm628, %v615, 0
        %v714 = vsel %vm628, %v616, 0
        %v717 = vsel %vm628, %v617, 0
        %v720 = vsel %vm628, %v618, 0
        %v723 = vsel %vm628, %v619, 0
        %v726 = vsel %vm628, %v620, 0
        %728 = vmatprep.subr.mxu0 0.0
        %729 = vmatpush1.xpose.msra.mxu0 %v633
        %730 = vmatprep.subr.mxu0 0.0
        %731 = vmatpush1.xpose.msra.mxu0 %v636
        %732 = vmatprep.subr.mxu0 0.0
        %733 = vmatpush1.xpose.msra.mxu0 %v639
        %734 = vmatprep.subr.mxu0 0.0
        %735 = vmatpush1.xpose.msra.mxu0 %v642
        %736 = vmatprep.subr.mxu0 0.0
        %737 = vmatpush1.xpose.msra.mxu0 %v645
        %738 = vmatprep.subr.mxu0 0.0
        %739 = vmatpush1.xpose.msra.mxu0 %v648
        %740 = vmatprep.subr.mxu0 0.0
        %741 = vmatpush1.xpose.msra.mxu0 %v651
        %742 = vmatprep.subr.mxu0 0.0
        %743 = vmatpush1.xpose.msra.mxu0 %v654
        %744 = vmatprep.subr.mxu0 0.0
        %745 = vmatpush1.xpose.msra.mxu0 %v657
        %746 = vmatprep.subr.mxu0 0.0
        %747 = vmatpush1.xpose.msra.mxu0 %v660
        %748 = vmatprep.subr.mxu0 0.0
        %749 = vmatpush1.xpose.msra.mxu0 %v663
        %750 = vmatprep.subr.mxu0 0.0
        %751 = vmatpush1.xpose.msra.mxu0 %v666
        %752 = vmatprep.subr.mxu0 0.0
        %753 = vmatpush1.xpose.msra.mxu0 %v669
        %754 = vmatprep.subr.mxu0 0.0
        %755 = vmatpush1.xpose.msra.mxu0 %v672
        %756 = vmatprep.subr.mxu0 0.0
        %757 = vmatpush1.xpose.msra.mxu0 %v675
        %758 = vmatprep.subr.mxu0 0.0
        %759 = vmatpush1.xpose.msra.mxu0 %v678
        %760 = vmatprep.subr.mxu0 0.0
        %761 = vmatpush1.xpose.msra.mxu0 %v681
        %762 = vmatprep.subr.mxu0 0.0
        %763 = vmatpush1.xpose.msra.mxu0 %v684
        %764 = vmatprep.subr.mxu0 0.0
        %765 = vmatpush1.xpose.msra.mxu0 %v687
        %766 = vmatprep.subr.mxu0 0.0
        %767 = vmatpush1.xpose.msra.mxu0 %v690
        %768 = vmatprep.subr.mxu0 0.0
        %769 = vmatpush1.xpose.msra.mxu0 %v693
        %770 = vmatprep.subr.mxu0 0.0
        %771 = vmatpush1.xpose.msra.mxu0 %v696
        %772 = vmatprep.subr.mxu0 0.0
        %773 = vmatpush1.xpose.msra.mxu0 %v699
        %774 = vmatprep.subr.mxu0 0.0
        %775 = vmatpush1.xpose.msra.mxu0 %v702
        %776 = vmatprep.subr.mxu0 0.0
        %777 = vmatpush1.xpose.msra.mxu0 %v705
        %778 = vmatprep.subr.mxu0 0.0
        %779 = vmatpush1.xpose.msra.mxu0 %v708
        %780 = vmatprep.subr.mxu0 0.0
        %781 = vmatpush1.xpose.msra.mxu0 %v711
        %782 = vmatprep.subr.mxu0 0.0
        %783 = vmatpush1.xpose.msra.mxu0 %v714
        %784 = vmatprep.subr.mxu0 0.0
        %785 = vmatpush1.xpose.msra.mxu0 %v717
        %786 = vmatprep.subr.mxu0 0.0
        %787 = vmatpush1.xpose.msra.mxu0 %v720
        %788 = vmatprep.subr.mxu0 0.0
        %789 = vmatpush1.xpose.msra.mxu0 %v723
        %790 = vmatprep.subr.mxu0 0.0
        %791 = vmatpush1.xpose.msra.mxu0 %v726
        %792 = vmatprep.mubr.f32.mxu0 0.0
        %793 = vmatmul.mubr.f32.gmra.mrb[0].mxu0 %v630
        %v794 = vpop.f32.mrb[0].mxu0
        %v795 = vadd.f32 %v626, %v794
        %v796 = vpop.f32.mrb[0].mxu0
        %v797 = vadd.f32 %v626, %v796
        %798 = vdwg.mxu0
        %v799 = vxor.u32 %v795, 2147483648
        %v800 = vxor.u32 %v797, 2147483648
        %v801 = vmul.f32 %v799, 1.442695
        %v802 = vpow.pop %v801
        %v803 = vmul.f32 %v800, 1.442695
        %v804 = vpow.pop %v803
        %v805 = vadd.f32 %v802, 1.0
        %v806 = vadd.f32 %v804, 1.0
        %v807 = vrcp.pop %v805
        %v808 = vmul.f32 1.0, %v807
        %v809 = vrcp.pop %v806
        %v810 = vmul.f32 1.0, %v809
        %v813 = vcombine.low %v808, %v810
        %815 = vst [vmem:[%s218] sm:$0x77] %v813
        %s816 = sand.u32 %s137, 1
        %s817 = scalar_lea.sflag [#allocation3], %s816
        %s818 = sand.u32 %s137, 1
        %s819 = smul.addr %s818, 8
        %s820 = scalar_lea.vmem [#allocation2], %s819
        // Predicated region
        $region41: #{tpu_custom_call.1} parent=39 // pred_check
          %p821 = pneg %p147
        $region42: #{tpu_custom_call.1} parent=39 // pred_check_branch
          %823 = sbr.rel (%p821) target = $region44
        $region43: #{tpu_custom_call.1} parent=39 // pred_region
          %s824 = smul.u32 2, %s19
          %s826 = ssub.s32 128, 128
          %827 = vsyncadd %s817, %s826
          %s828 = smul.addr %s824, 64
          %s829 = scalar_lea.hbm %s5, %s828
          %s831 = sshll.u32 %s820, 4
          %s832 = int_to_ptr.vmem [resolvable:$true] %s831
          %834 = dma.vmem_to_hbm [thread:$0]  %s832, 128, %s829, %s817
        $region44: #{tpu_custom_call.1} parent=39 // pred_fallthru
          _
      $region40: #{tpu_custom_call.1} parent=5 // pred_fallthru
        _
      %p835 = scmp.le.s32.totalorder 2, %s14
      // Predicated region
      $region45: #{tpu_custom_call.1} parent=5 // pred_check
        %p836 = pneg %p835
      $region46: #{tpu_custom_call.1} parent=5 // pred_check_branch
        %838 = sbr.rel (%p836) target = $region48
      $region47: #{tpu_custom_call.1} parent=5 // pred_region
        %s839 = ssub.s32 %s14, 2
        // Predicated region
        $region49: #{tpu_custom_call.1} parent=47 // pred_check
          %p840 = pneg %p153
        $region50: #{tpu_custom_call.1} parent=47 // pred_check_branch
          %842 = sbr.rel (%p840) target = $region52
        $region51: #{tpu_custom_call.1} parent=47 // pred_region
          %s843 = sand.u32 %s138, 1
          %s844 = scalar_lea.sflag [#allocation3], %s843
          %s845 = sand.u32 %s138, 1
          %s846 = smul.addr %s845, 8
          %s847 = scalar_lea.vmem [#allocation2], %s846
          %848 = dma.done %s844, 128
        $region52: #{tpu_custom_call.1} parent=47 // pred_fallthru
          _
      $region48: #{tpu_custom_call.1} parent=5 // pred_fallthru
        _
    $region6: #{tpu_custom_call.1} parent=1 // loop_footer
      %s18 = sadd.s32 1, %s14
    $region7: #{tpu_custom_call.1} parent=1 // loop_footer_branch
      %13 = sbr.rel target = $region3
    $region8: #{tpu_custom_call.1} parent=1 // loop_exit
      _
    %849 = vsyncpa [#allocation3], 1
    %s850 = scalar_lea.sflag [#allocation3], 1
    %851 = vsyncpa %s850, 1

</llo_original>
